<compile_context>
chip_gen: v7x
topology: tpu7x:2x2x1
jax: 0.10.0
libtpu: 0.0.40
codegen_flags: <defaults>
</compile_context>

<pallas_src>
import functools
import math

import numpy as np

import jax
import jax.numpy as jnp
from jax.experimental import pallas as pl
from jax.experimental.pallas import tpu as pltpu


def _fract(v):
    # v - trunc(v): differs from v by an integer, exact for |v| < 2^23 -> safe to
    # feed into cos(2*pi * .) which only cares about the value mod 1.
    return v - v.astype(jnp.int32).astype(jnp.float32)


def _freq_flow_kernel(amp_ref, f0h_ref, f0l_ref, phase_ref, x_ref, z_ref, *,
                      inv_sigma_n, tn, chunk, reseed):
    """One (tb, tn) tile of z = (x - amp*cos(2*pi*f0*n + phase)) / sigma_n."""
    j = pl.program_id(1)                       # sample-tile index
    tb = x_ref.shape[0]
    W = chunk
    C = tn // W

    amp = amp_ref[...]                         # (tb, 1) f32
    f0h = f0h_ref[...]                         # high split: f0h * n is exact
    f0l = f0l_ref[...]
    phase = phase_ref[...]

    two_pi = jnp.float32(2.0 * math.pi)
    inv = jnp.float32(inv_sigma_n)
    need_rot = C > 1

    if need_rot:
        # Per-row rotation angle delta = 2*pi*f0*W (mod 2*pi), reduced the same way
        # as the seed (W <= 2**n_bits, so f0h*W is exact).
        wf = jnp.float32(W)
        tw = _fract(f0h * wf) + f0l * wf
        delta = two_pi * tw
        cd = jnp.cos(delta)                    # (tb, 1)
        sd = jnp.sin(delta)

    lane = jax.lax.broadcasted_iota(jnp.int32, (tb, W), 1)
    col0 = j * tn

    cs = sn = None
    for c in range(C):                         # static unrolled chunk loop
        if c % reseed == 0:
            # (Re)seed: full cos/sin on an accurately range-reduced angle.
            # 2*pi*f0*n == 2*pi*(f0*n mod 1) (mod 2*pi); f0h*n is exact, so theta
            # stays small and f32 cos is well conditioned even for large n.
            n = (lane + (col0 + c * W)).astype(jnp.float32)
            t = _fract(f0h * n) + f0l * n
            theta = two_pi * t + phase
            cs = jnp.cos(theta)                # (tb, W)
            if need_rot:
                sn = jnp.sin(theta)
        lo = c * W
        xb = x_ref[:, lo:lo + W].astype(jnp.float32)
        z_ref[:, lo:lo + W] = ((xb - amp * cs) * inv).astype(z_ref.dtype)
        if need_rot and (c + 1 < C) and ((c + 1) % reseed != 0):
            # Angle-addition recurrence: advance the chunk by delta
            # (4 mul + 2 add per element instead of a fresh ~20-op cos polynomial).
            cs, sn = cs * cd - sn * sd, sn * cd + cs * sd


def frequency_optimal_flow_forward(x, cond, sigma_n, *, tb=None, tn=None,
                                   chunk=None, reseed=16):
    """Forward pass of FrequencyOptimalFlow. Returns (z, logdet=0)."""
    B, N = x.shape
    itemsize = jnp.dtype(x.dtype).itemsize
    # dtype-aware minimum sublane tile (f32: 8, bf16: 16, int8/fp8: 32).
    min_tb = {4: 8, 2: 16, 1: 32}.get(itemsize, 8)

    auto = tb is None and tn is None
    if tb is None:
        cands = [c for c in (512, 256, 128, 64, 32, 16, 8) if c >= min_tb and B % c == 0]
        tb = cands[0] if cands else B
    if tn is None:
        # Couple tn to tb so each x/z block targets ~2 MiB; 2 streams x 2 buffers
        # stays well inside every generation's scoped-VMEM budget.
        tn = N
        for w in (16384, 8192, 4096, 2048, 1024, 512, 256, 128):
            if N % w == 0 and tb * w * itemsize <= (2 << 20):
                tn = w
                break
    if auto and (B // tb) * (N // tn) == 1:
        # Expose >= 2 steps on a parallel axis so both v7x TensorCores get work.
        if B % 2 == 0 and (B // 2) % min_tb == 0:
            tb = B // 2
        elif tn % 256 == 0:
            tn //= 2
    assert B % tb == 0 and N % tn == 0, (B, N, tb, tn)

    if chunk is None:
        chunk = next((w for w in (256, 512, 128) if tn % w == 0), tn)
    assert tn % chunk == 0

    # Split f0 = f0_hi + f0_lo so f0_hi * n is exact for every n < 2**n_bits.
    n_bits = max(12, max(N - 1, 1).bit_length())
    # TODO(synk): for N > 8192 a single-level split leaves a large f0_lo*n term;
    # add a second reduction level (split n as well) for very long signals.
    cond_f32 = cond.astype(jnp.float32)        # tiny (B, 3)
    amp = cond_f32[:, 0:1]
    f0 = cond_f32[:, 1:2]
    phase = cond_f32[:, 2:3]
    mask = jnp.int32(-(1 << n_bits))           # clears the low n_bits mantissa bits
    f0_hi = jax.lax.bitcast_convert_type(
        jax.lax.bitcast_convert_type(f0, jnp.int32) & mask, jnp.float32)
    f0_lo = f0 - f0_hi                         # exact

    kernel = functools.partial(
        _freq_flow_kernel,
        inv_sigma_n=1.0 / float(sigma_n), tn=tn, chunk=chunk, reseed=int(reseed))

    block_bytes = tb * tn * itemsize
    # 2 double-buffered streams (x in, z out) + chunk temporaries + slack; capped
    # well below v7x's 64 MiB physical VMEM per core.
    vmem_limit = min(max(4 * block_bytes + (4 << 20), 16 << 20), 32 << 20)

    row_spec = pl.BlockSpec((tb, 1), lambda i, j: (i, 0))
    z = pl.pallas_call(
        kernel,
        out_shape=jax.ShapeDtypeStruct((B, N), x.dtype),
        grid_spec=pltpu.PrefetchScalarGridSpec(
            num_scalar_prefetch=0,
            grid=(B // tb, N // tn),
            in_specs=[row_spec, row_spec, row_spec, row_spec,
                      pl.BlockSpec((tb, tn), lambda i, j: (i, j))],
            out_specs=pl.BlockSpec((tb, tn), lambda i, j: (i, j)),
        ),
        compiler_params=pltpu.CompilerParams(
            dimension_semantics=("parallel", "parallel"),
            vmem_limit_bytes=vmem_limit,
        ),
    )(amp, f0_hi, f0_lo, phase, x)
    return z, jnp.zeros((), jnp.float32)


def _reference_forward_f64(x, cond, sigma_n):
    x64 = np.asarray(x, dtype=np.float64)
    c64 = np.asarray(cond, dtype=np.float64)
    n = np.arange(x64.shape[1], dtype=np.float64)[None, :]
    sine = c64[:, 0:1] * np.cos(2.0 * np.pi * c64[:, 1:2] * n + c64[:, 2:3])
    return (x64 - sine) / float(sigma_n)


if __name__ == "__main__":
    # Module "parameters".
    n_samples = 2048
    sigma_n = 0.1

    # Small deterministic example: 16 noisy sinusoids + their (amp, f0, phase).
    B = 16
    key = jax.random.PRNGKey(0)
    kx, ka, kf, kp = jax.random.split(key, 4)
    x = jax.random.normal(kx, (B, n_samples), dtype=jnp.float32)
    amp = 0.5 + jax.random.uniform(ka, (B, 1), dtype=jnp.float32)
    f0 = jax.random.uniform(kf, (B, 1), dtype=jnp.float32) * 0.4
    phase = jax.random.uniform(kp, (B, 1), dtype=jnp.float32) * (2.0 * math.pi)
    cond = jnp.concatenate([amp, f0, phase], axis=1)

    z_ref = _reference_forward_f64(x, cond, sigma_n)

    # f32 compute scaled by 1/sigma_n = 10x plus bounded recurrence drift
    # -> expected error vs the float64 reference is a few 1e-4.
    tol = dict(atol=2e-3, rtol=2e-3)

    configs = [
        dict(),                                    # auto tiles: grid (2,1), 8 chunks
        dict(tb=8, tn=256),                        # multi-step 2-D grid, seed-only path
        dict(tb=8, tn=1024, chunk=128),            # recurrence + nonzero column offsets
        dict(tb=8, tn=2048, chunk=128, reseed=4),  # exercises periodic reseeding
    ]
    for cfg in configs:
        z, logdet = frequency_optimal_flow_forward(x, cond, sigma_n, **cfg)
        z = jax.block_until_ready(z)
        assert int(logdet) == 0
        assert np.allclose(np.asarray(z, dtype=np.float64), z_ref, **tol), (
            f"mismatch vs float64 reference for config {cfg}: max_abs_err="
            f"{np.max(np.abs(np.asarray(z, np.float64) - z_ref))}")

    print("KERNEL_OK")
</pallas_src>

<mosaic_0001>
module attributes {stable_mosaic.version = 11 : i64} {
  func.func @_freq_flow_kernel(%arg0: i32, %arg1: i32, %arg2: memref<8x1xf32, #tpu.memory_space<vmem>>, %arg3: memref<8x1xf32, #tpu.memory_space<vmem>>, %arg4: memref<8x1xf32, #tpu.memory_space<vmem>>, %arg5: memref<8x1xf32, #tpu.memory_space<vmem>>, %arg6: memref<8x2048xf32, #tpu.memory_space<vmem>>, %arg7: memref<8x2048xf32, #tpu.memory_space<vmem>>) attributes {dimension_semantics = [#tpu.dimension_semantics<parallel>, #tpu.dimension_semantics<parallel>], iteration_bounds = array<i64: 2, 1>, scalar_prefetch = 0 : i64, scratch_operands = 0 : i64, tpu.core_type = #tpu.core_type<tc>, window_params = [{transform_indices = @transform_0, window_bounds = array<i64: 8, 1>}, {transform_indices = @transform_1, window_bounds = array<i64: 8, 1>}, {transform_indices = @transform_2, window_bounds = array<i64: 8, 1>}, {transform_indices = @transform_3, window_bounds = array<i64: 8, 1>}, {transform_indices = @transform_4, window_bounds = array<i64: 8, 2048>}, {transform_indices = @transform_5, window_bounds = array<i64: 8, 2048>}]} {
    %c0 = arith.constant 0 : index
    %c0_0 = arith.constant 0 : index
    %0 = vector.load %arg2[%c0, %c0_0] : memref<8x1xf32, #tpu.memory_space<vmem>>, vector<8x1xf32>
    %c0_1 = arith.constant 0 : index
    %c0_2 = arith.constant 0 : index
    %1 = vector.load %arg3[%c0_1, %c0_2] : memref<8x1xf32, #tpu.memory_space<vmem>>, vector<8x1xf32>
    %c0_3 = arith.constant 0 : index
    %c0_4 = arith.constant 0 : index
    %2 = vector.load %arg4[%c0_3, %c0_4] : memref<8x1xf32, #tpu.memory_space<vmem>>, vector<8x1xf32>
    %c0_5 = arith.constant 0 : index
    %c0_6 = arith.constant 0 : index
    %3 = vector.load %arg5[%c0_5, %c0_6] : memref<8x1xf32, #tpu.memory_space<vmem>>, vector<8x1xf32>
    %cst = arith.constant 2.560000e+02 : f32
    %4 = vector.broadcast %cst : f32 to vector<8x1xf32>
    %5 = arith.mulf %1, %4 : vector<8x1xf32>
    %6 = arith.fptosi %5 : vector<8x1xf32> to vector<8x1xi32>
    %7 = arith.sitofp %6 : vector<8x1xi32> to vector<8x1xf32>
    %8 = arith.subf %5, %7 : vector<8x1xf32>
    %cst_7 = arith.constant 2.560000e+02 : f32
    %9 = vector.broadcast %cst_7 : f32 to vector<8x1xf32>
    %10 = arith.mulf %2, %9 : vector<8x1xf32>
    %11 = arith.addf %8, %10 : vector<8x1xf32>
    %cst_8 = arith.constant 6.28318548 : f32
    %12 = vector.broadcast %cst_8 : f32 to vector<8x1xf32>
    %13 = arith.mulf %12, %11 : vector<8x1xf32>
    %14 = math.cos %13 : vector<8x1xf32>
    %15 = math.sin %13 : vector<8x1xf32>
    %16 = tpu.iota {dimensions = array<i32: 1>} : vector<8x256xi32>
    %c2048_i32 = arith.constant 2048 : i32
    %17 = arith.muli %arg1, %c2048_i32 : i32
    %c0_i32 = arith.constant 0 : i32
    %18 = arith.addi %17, %c0_i32 : i32
    %19 = vector.broadcast %18 : i32 to vector<8x256xi32>
    %20 = arith.addi %16, %19 : vector<8x256xi32>
    %21 = arith.sitofp %20 : vector<8x256xi32> to vector<8x256xf32>
    %22 = vector.broadcast %1 : vector<8x1xf32> to vector<8x256xf32>
    %23 = arith.mulf %22, %21 : vector<8x256xf32>
    %24 = arith.fptosi %23 : vector<8x256xf32> to vector<8x256xi32>
    %25 = arith.sitofp %24 : vector<8x256xi32> to vector<8x256xf32>
    %26 = arith.subf %23, %25 : vector<8x256xf32>
    %27 = vector.broadcast %2 : vector<8x1xf32> to vector<8x256xf32>
    %28 = arith.mulf %27, %21 : vector<8x256xf32>
    %29 = arith.addf %26, %28 : vector<8x256xf32>
    %cst_9 = arith.constant 6.28318548 : f32
    %30 = vector.broadcast %cst_9 : f32 to vector<8x256xf32>
    %31 = arith.mulf %30, %29 : vector<8x256xf32>
    %32 = vector.broadcast %3 : vector<8x1xf32> to vector<8x256xf32>
    %33 = arith.addf %31, %32 : vector<8x256xf32>
    %34 = math.cos %33 : vector<8x256xf32>
    %35 = math.sin %33 : vector<8x256xf32>
    %c0_10 = arith.constant 0 : index
    %c0_11 = arith.constant 0 : index
    %36 = vector.load %arg6[%c0_10, %c0_11] : memref<8x2048xf32, #tpu.memory_space<vmem>>, vector<8x256xf32>
    %37 = vector.broadcast %0 : vector<8x1xf32> to vector<8x256xf32>
    %38 = arith.mulf %37, %34 : vector<8x256xf32>
    %39 = arith.subf %36, %38 : vector<8x256xf32>
    %cst_12 = arith.constant 1.000000e+01 : f32
    %40 = vector.broadcast %cst_12 : f32 to vector<8x256xf32>
    %41 = arith.mulf %39, %40 : vector<8x256xf32>
    %c0_13 = arith.constant 0 : index
    %c0_14 = arith.constant 0 : index
    %42 = vector.load %arg7[%c0_13, %c0_14] : memref<8x2048xf32, #tpu.memory_space<vmem>>, vector<8x256xf32>
    tpu.vector_store %arg7[%c0_13, %c0_14], %41 {strides = array<i32>} : memref<8x2048xf32, #tpu.memory_space<vmem>>, vector<8x256xf32>,
    %43 = vector.broadcast %14 : vector<8x1xf32> to vector<8x256xf32>
    %44 = arith.mulf %34, %43 : vector<8x256xf32>
    %45 = vector.broadcast %15 : vector<8x1xf32> to vector<8x256xf32>
    %46 = arith.mulf %35, %45 : vector<8x256xf32>
    %47 = arith.subf %44, %46 : vector<8x256xf32>
    %48 = vector.broadcast %14 : vector<8x1xf32> to vector<8x256xf32>
    %49 = arith.mulf %35, %48 : vector<8x256xf32>
    %50 = vector.broadcast %15 : vector<8x1xf32> to vector<8x256xf32>
    %51 = arith.mulf %34, %50 : vector<8x256xf32>
    %52 = arith.addf %49, %51 : vector<8x256xf32>
    %c0_15 = arith.constant 0 : index
    %c256 = arith.constant 256 : index
    %53 = vector.load %arg6[%c0_15, %c256] : memref<8x2048xf32, #tpu.memory_space<vmem>>, vector<8x256xf32>
    %54 = vector.broadcast %0 : vector<8x1xf32> to vector<8x256xf32>
    %55 = arith.mulf %54, %47 : vector<8x256xf32>
    %56 = arith.subf %53, %55 : vector<8x256xf32>
    %cst_16 = arith.constant 1.000000e+01 : f32
    %57 = vector.broadcast %cst_16 : f32 to vector<8x256xf32>
    %58 = arith.mulf %56, %57 : vector<8x256xf32>
    %c0_17 = arith.constant 0 : index
    %c256_18 = arith.constant 256 : index
    %59 = vector.load %arg7[%c0_17, %c256_18] : memref<8x2048xf32, #tpu.memory_space<vmem>>, vector<8x256xf32>
    tpu.vector_store %arg7[%c0_17, %c256_18], %58 {strides = array<i32>} : memref<8x2048xf32, #tpu.memory_space<vmem>>, vector<8x256xf32>,
    %60 = vector.broadcast %14 : vector<8x1xf32> to vector<8x256xf32>
    %61 = arith.mulf %47, %60 : vector<8x256xf32>
    %62 = vector.broadcast %15 : vector<8x1xf32> to vector<8x256xf32>
    %63 = arith.mulf %52, %62 : vector<8x256xf32>
    %64 = arith.subf %61, %63 : vector<8x256xf32>
    %65 = vector.broadcast %14 : vector<8x1xf32> to vector<8x256xf32>
    %66 = arith.mulf %52, %65 : vector<8x256xf32>
    %67 = vector.broadcast %15 : vector<8x1xf32> to vector<8x256xf32>
    %68 = arith.mulf %47, %67 : vector<8x256xf32>
    %69 = arith.addf %66, %68 : vector<8x256xf32>
    %c0_19 = arith.constant 0 : index
    %c512 = arith.constant 512 : index
    %70 = vector.load %arg6[%c0_19, %c512] : memref<8x2048xf32, #tpu.memory_space<vmem>>, vector<8x256xf32>
    %71 = vector.broadcast %0 : vector<8x1xf32> to vector<8x256xf32>
    %72 = arith.mulf %71, %64 : vector<8x256xf32>
    %73 = arith.subf %70, %72 : vector<8x256xf32>
    %cst_20 = arith.constant 1.000000e+01 : f32
    %74 = vector.broadcast %cst_20 : f32 to vector<8x256xf32>
    %75 = arith.mulf %73, %74 : vector<8x256xf32>
    %c0_21 = arith.constant 0 : index
    %c512_22 = arith.constant 512 : index
    %76 = vector.load %arg7[%c0_21, %c512_22] : memref<8x2048xf32, #tpu.memory_space<vmem>>, vector<8x256xf32>
    tpu.vector_store %arg7[%c0_21, %c512_22], %75 {strides = array<i32>} : memref<8x2048xf32, #tpu.memory_space<vmem>>, vector<8x256xf32>,
    %77 = vector.broadcast %14 : vector<8x1xf32> to vector<8x256xf32>
    %78 = arith.mulf %64, %77 : vector<8x256xf32>
    %79 = vector.broadcast %15 : vector<8x1xf32> to vector<8x256xf32>
    %80 = arith.mulf %69, %79 : vector<8x256xf32>
    %81 = arith.subf %78, %80 : vector<8x256xf32>
    %82 = vector.broadcast %14 : vector<8x1xf32> to vector<8x256xf32>
    %83 = arith.mulf %69, %82 : vector<8x256xf32>
    %84 = vector.broadcast %15 : vector<8x1xf32> to vector<8x256xf32>
    %85 = arith.mulf %64, %84 : vector<8x256xf32>
    %86 = arith.addf %83, %85 : vector<8x256xf32>
    %c0_23 = arith.constant 0 : index
    %c768 = arith.constant 768 : index
    %87 = vector.load %arg6[%c0_23, %c768] : memref<8x2048xf32, #tpu.memory_space<vmem>>, vector<8x256xf32>
    %88 = vector.broadcast %0 : vector<8x1xf32> to vector<8x256xf32>
    %89 = arith.mulf %88, %81 : vector<8x256xf32>
    %90 = arith.subf %87, %89 : vector<8x256xf32>
    %cst_24 = arith.constant 1.000000e+01 : f32
    %91 = vector.broadcast %cst_24 : f32 to vector<8x256xf32>
    %92 = arith.mulf %90, %91 : vector<8x256xf32>
    %c0_25 = arith.constant 0 : index
    %c768_26 = arith.constant 768 : index
    %93 = vector.load %arg7[%c0_25, %c768_26] : memref<8x2048xf32, #tpu.memory_space<vmem>>, vector<8x256xf32>
    tpu.vector_store %arg7[%c0_25, %c768_26], %92 {strides = array<i32>} : memref<8x2048xf32, #tpu.memory_space<vmem>>, vector<8x256xf32>,
    %94 = vector.broadcast %14 : vector<8x1xf32> to vector<8x256xf32>
    %95 = arith.mulf %81, %94 : vector<8x256xf32>
    %96 = vector.broadcast %15 : vector<8x1xf32> to vector<8x256xf32>
    %97 = arith.mulf %86, %96 : vector<8x256xf32>
    %98 = arith.subf %95, %97 : vector<8x256xf32>
    %99 = vector.broadcast %14 : vector<8x1xf32> to vector<8x256xf32>
    %100 = arith.mulf %86, %99 : vector<8x256xf32>
    %101 = vector.broadcast %15 : vector<8x1xf32> to vector<8x256xf32>
    %102 = arith.mulf %81, %101 : vector<8x256xf32>
    %103 = arith.addf %100, %102 : vector<8x256xf32>
    %c0_27 = arith.constant 0 : index
    %c1024 = arith.constant 1024 : index
    %104 = vector.load %arg6[%c0_27, %c1024] : memref<8x2048xf32, #tpu.memory_space<vmem>>, vector<8x256xf32>
    %105 = vector.broadcast %0 : vector<8x1xf32> to vector<8x256xf32>
    %106 = arith.mulf %105, %98 : vector<8x256xf32>
    %107 = arith.subf %104, %106 : vector<8x256xf32>
    %cst_28 = arith.constant 1.000000e+01 : f32
    %108 = vector.broadcast %cst_28 : f32 to vector<8x256xf32>
    %109 = arith.mulf %107, %108 : vector<8x256xf32>
    %c0_29 = arith.constant 0 : index
    %c1024_30 = arith.constant 1024 : index
    %110 = vector.load %arg7[%c0_29, %c1024_30] : memref<8x2048xf32, #tpu.memory_space<vmem>>, vector<8x256xf32>
    tpu.vector_store %arg7[%c0_29, %c1024_30], %109 {strides = array<i32>} : memref<8x2048xf32, #tpu.memory_space<vmem>>, vector<8x256xf32>,
    %111 = vector.broadcast %14 : vector<8x1xf32> to vector<8x256xf32>
    %112 = arith.mulf %98, %111 : vector<8x256xf32>
    %113 = vector.broadcast %15 : vector<8x1xf32> to vector<8x256xf32>
    %114 = arith.mulf %103, %113 : vector<8x256xf32>
    %115 = arith.subf %112, %114 : vector<8x256xf32>
    %116 = vector.broadcast %14 : vector<8x1xf32> to vector<8x256xf32>
    %117 = arith.mulf %103, %116 : vector<8x256xf32>
    %118 = vector.broadcast %15 : vector<8x1xf32> to vector<8x256xf32>
    %119 = arith.mulf %98, %118 : vector<8x256xf32>
    %120 = arith.addf %117, %119 : vector<8x256xf32>
    %c0_31 = arith.constant 0 : index
    %c1280 = arith.constant 1280 : index
    %121 = vector.load %arg6[%c0_31, %c1280] : memref<8x2048xf32, #tpu.memory_space<vmem>>, vector<8x256xf32>
    %122 = vector.broadcast %0 : vector<8x1xf32> to vector<8x256xf32>
    %123 = arith.mulf %122, %115 : vector<8x256xf32>
    %124 = arith.subf %121, %123 : vector<8x256xf32>
    %cst_32 = arith.constant 1.000000e+01 : f32
    %125 = vector.broadcast %cst_32 : f32 to vector<8x256xf32>
    %126 = arith.mulf %124, %125 : vector<8x256xf32>
    %c0_33 = arith.constant 0 : index
    %c1280_34 = arith.constant 1280 : index
    %127 = vector.load %arg7[%c0_33, %c1280_34] : memref<8x2048xf32, #tpu.memory_space<vmem>>, vector<8x256xf32>
    tpu.vector_store %arg7[%c0_33, %c1280_34], %126 {strides = array<i32>} : memref<8x2048xf32, #tpu.memory_space<vmem>>, vector<8x256xf32>,
    %128 = vector.broadcast %14 : vector<8x1xf32> to vector<8x256xf32>
    %129 = arith.mulf %115, %128 : vector<8x256xf32>
    %130 = vector.broadcast %15 : vector<8x1xf32> to vector<8x256xf32>
    %131 = arith.mulf %120, %130 : vector<8x256xf32>
    %132 = arith.subf %129, %131 : vector<8x256xf32>
    %133 = vector.broadcast %14 : vector<8x1xf32> to vector<8x256xf32>
    %134 = arith.mulf %120, %133 : vector<8x256xf32>
    %135 = vector.broadcast %15 : vector<8x1xf32> to vector<8x256xf32>
    %136 = arith.mulf %115, %135 : vector<8x256xf32>
    %137 = arith.addf %134, %136 : vector<8x256xf32>
    %c0_35 = arith.constant 0 : index
    %c1536 = arith.constant 1536 : index
    %138 = vector.load %arg6[%c0_35, %c1536] : memref<8x2048xf32, #tpu.memory_space<vmem>>, vector<8x256xf32>
    %139 = vector.broadcast %0 : vector<8x1xf32> to vector<8x256xf32>
    %140 = arith.mulf %139, %132 : vector<8x256xf32>
    %141 = arith.subf %138, %140 : vector<8x256xf32>
    %cst_36 = arith.constant 1.000000e+01 : f32
    %142 = vector.broadcast %cst_36 : f32 to vector<8x256xf32>
    %143 = arith.mulf %141, %142 : vector<8x256xf32>
    %c0_37 = arith.constant 0 : index
    %c1536_38 = arith.constant 1536 : index
    %144 = vector.load %arg7[%c0_37, %c1536_38] : memref<8x2048xf32, #tpu.memory_space<vmem>>, vector<8x256xf32>
    tpu.vector_store %arg7[%c0_37, %c1536_38], %143 {strides = array<i32>} : memref<8x2048xf32, #tpu.memory_space<vmem>>, vector<8x256xf32>,
    %145 = vector.broadcast %14 : vector<8x1xf32> to vector<8x256xf32>
    %146 = arith.mulf %132, %145 : vector<8x256xf32>
    %147 = vector.broadcast %15 : vector<8x1xf32> to vector<8x256xf32>
    %148 = arith.mulf %137, %147 : vector<8x256xf32>
    %149 = arith.subf %146, %148 : vector<8x256xf32>
    %c0_39 = arith.constant 0 : index
    %c1792 = arith.constant 1792 : index
    %150 = vector.load %arg6[%c0_39, %c1792] : memref<8x2048xf32, #tpu.memory_space<vmem>>, vector<8x256xf32>
    %151 = vector.broadcast %0 : vector<8x1xf32> to vector<8x256xf32>
    %152 = arith.mulf %151, %149 : vector<8x256xf32>
    %153 = arith.subf %150, %152 : vector<8x256xf32>
    %cst_40 = arith.constant 1.000000e+01 : f32
    %154 = vector.broadcast %cst_40 : f32 to vector<8x256xf32>
    %155 = arith.mulf %153, %154 : vector<8x256xf32>
    %c0_41 = arith.constant 0 : index
    %c1792_42 = arith.constant 1792 : index
    %156 = vector.load %arg7[%c0_41, %c1792_42] : memref<8x2048xf32, #tpu.memory_space<vmem>>, vector<8x256xf32>
    tpu.vector_store %arg7[%c0_41, %c1792_42], %155 {strides = array<i32>} : memref<8x2048xf32, #tpu.memory_space<vmem>>, vector<8x256xf32>,
    return
  }
  func.func @transform_0(%arg0: i32, %arg1: i32) -> (i32, i32) {
    %c0_i32 = arith.constant 0 : i32
    %c0_i32_0 = arith.constant 0 : i32
    return %arg0, %c0_i32 : i32, i32
  }
  func.func @transform_1(%arg0: i32, %arg1: i32) -> (i32, i32) {
    %c0_i32 = arith.constant 0 : i32
    %c0_i32_0 = arith.constant 0 : i32
    return %arg0, %c0_i32 : i32, i32
  }
  func.func @transform_2(%arg0: i32, %arg1: i32) -> (i32, i32) {
    %c0_i32 = arith.constant 0 : i32
    %c0_i32_0 = arith.constant 0 : i32
    return %arg0, %c0_i32 : i32, i32
  }
  func.func @transform_3(%arg0: i32, %arg1: i32) -> (i32, i32) {
    %c0_i32 = arith.constant 0 : i32
    %c0_i32_0 = arith.constant 0 : i32
    return %arg0, %c0_i32 : i32, i32
  }
  func.func @transform_4(%arg0: i32, %arg1: i32) -> (i32, i32) {
    %c0_i32 = arith.constant 0 : i32
    return %arg0, %arg1 : i32, i32
  }
  func.func @transform_5(%arg0: i32, %arg1: i32) -> (i32, i32) {
    %c0_i32 = arith.constant 0 : i32
    return %arg0, %arg1 : i32, i32
  }
}

</mosaic_0001>

<llo_original>
// kernel: tpu_custom_call.1
$region0: #{tpu_custom_call.1}
  #allocation0 [shape = 'u32[]', space=smem, size = 0x4, offset = 0x4, fixed_abs, tag = 'smem constant byte address 0x4 - core index']
  #allocation1 [shape = 'u32[144,128]{1,0:T(1,128)}', space=vmem, size = 0x12000, scoped, tag = 'internal scratch']
  %s0 = inlined_call_operand.vmem [shape: f32[16,1], index: 0, kind: input, shape index: {}]
  %s1 = inlined_call_operand.vmem [shape: f32[16,1], index: 1, kind: input, shape index: {}]
  %s2 = inlined_call_operand.vmem [shape: f32[16,1], index: 2, kind: input, shape index: {}]
  %s3 = inlined_call_operand.vmem [shape: f32[16,1], index: 3, kind: input, shape index: {}]
  %s4 = inlined_call_operand.hbm [shape: f32[16,2048], index: 4, kind: input, shape index: {}]
  %s5 = inlined_call_operand.hbm [shape: f32[16,2048], index: 5, kind: output, shape index: {}]
  %s6 = sld [smem:[#allocation0]]
  $region57: #{tpu_custom_call.1} parent=0
    _
  %s8 = ssub.s32 1, %s6
  %s9 = scalar_select 0, %s8, %s6
  $region1: #{tpu_custom_call.1} parent=0
    #allocation2 [shape = 'u8[131072]{0}', space=vmem, size = 0x20000, scoped, tag = 'input window, operand 4']
    #allocation3 [shape = 's32[2]{0}', space=sflag, size = 0x8, scoped, tag = 'scoped memory for tpu_custom_call.1']
    #allocation4 [shape = 's32[2]{0}', space=sflag, size = 0x8, scoped, tag = 'scoped memory for tpu_custom_call.1']
    #allocation5 [shape = 'u8[131072]{0}', space=vmem, size = 0x20000, scoped, tag = 'output window, operand 0']
    %10 = vsyncpa [#allocation3], 0
    %s11 = scalar_lea.sflag [#allocation3], 1
    %12 = vsyncpa %s11, 0
    %13 = vsyncpa [#allocation4], 0
    %s14 = scalar_lea.sflag [#allocation4], 1
    %15 = vsyncpa %s14, 0
    loop: start=0, step=1, limit=4
    $region2: #{tpu_custom_call.1} parent=1 // loop_pre_header
      _
    $region3: #{tpu_custom_call.1} parent=1 // loop_header
      %s17 = sphi 0, %s21
      %p18 = scmp.ge.s32.totalorder %s17, 4
      %s24 = sphi 0, %s36
      %s25 = sphi 0, %s32
      %s26 = sphi 0, %s24
      %s27 = sphi 0, %s25
      %s28 = sphi 0, %s26
      %s29 = sphi 0, %s27
      %s39 = sphi 0, %s41
      %s42 = sphi 0, %s39
      %s43 = sphi 0, %s42
      %s59 = sphi 0, %s43
      %s65 = sphi 0, %s67
      %s68 = sphi 0, %s65
      %s69 = sphi 0, %s68
      %s85 = sphi 0, %s69
      %s91 = sphi 0, %s93
      %s94 = sphi 0, %s91
      %s95 = sphi 0, %s94
      %s111 = sphi 0, %s95
      %s117 = sphi 0, %s119
      %s120 = sphi 0, %s117
      %s121 = sphi 0, %s120
      %s137 = sphi 0, %s121
      %s145 = sphi 0, %s147
      %s148 = sphi 0, %s145
      %s149 = sphi 0, %s148
      %s165 = sphi 0, %s149
      %s173 = sphi 0, %s175
      %s176 = sphi 0, %s173
      %s177 = sphi 0, %s176
      %s193 = sphi 0, %s177
    $region4: #{tpu_custom_call.1} parent=1 // loop_header_branch
      %20 = sbr.rel (%p18) target = $region8
    $region5: #{tpu_custom_call.1} parent=1 // loop_body
      %s22 = ssub.s32 %s17, 1
      %s23 = ssub.s32 %s17, 2
      %s30 = sadd.s32 1, %s25
      %p31 = scmp.ge.s32.totalorder %s30, 1
      %s32 = scalar_select %p31, 0, %s30
      %s33 = sadd.s32 1, %s24
      %s34 = scalar_select %p31, %s33, %s24
      %p35 = scmp.ge.s32.totalorder %s34, 2
      %s36 = scalar_select %p35, 0, %s34
      %s37 = ssub.s32 %s24, %s36
      %p38 = scmp.eq.s32.totalorder %s37, 0
      %s40 = sadd.s32 %s39, 1
      %s41 = scalar_select %p38, %s39, %s40
      %p44 = pneg %p38
      %p45 = scmp.eq.s32.totalorder %s17, 1
      %p46 = por %p44, %p45
      %p47 = scmp.ne.s32.totalorder %s39, %s42
      %p48 = scmp.eq.s32.totalorder %s17, 0
      %p49 = por %p47, %p48
      %p50 = scmp.ne.s32.totalorder %s39, %s42
      %p51 = scmp.eq.s32.totalorder %s22, 1
      %p52 = por %p50, %p51
      %p53 = scmp.ne.s32.totalorder %s42, %s43
      %p54 = scmp.eq.s32.totalorder %s22, 0
      %p55 = por %p53, %p54
      %p56 = scmp.ne.s32.totalorder %s42, %s43
      %p57 = scmp.eq.s32.totalorder %s23, 1
      %p58 = por %p56, %p57
      %p60 = scmp.ne.s32.totalorder %s43, %s59
      %p61 = scmp.eq.s32.totalorder %s23, 0
      %p62 = por %p60, %p61
      %s63 = ssub.s32 %s24, %s36
      %p64 = scmp.eq.s32.totalorder %s63, 0
      %s66 = sadd.s32 %s65, 1
      %s67 = scalar_select %p64, %s65, %s66
      %p70 = pneg %p64
      %p71 = scmp.eq.s32.totalorder %s17, 1
      %p72 = por %p70, %p71
      %p73 = scmp.ne.s32.totalorder %s65, %s68
      %p74 = scmp.eq.s32.totalorder %s17, 0
      %p75 = por %p73, %p74
      %p76 = scmp.ne.s32.totalorder %s65, %s68
      %p77 = scmp.eq.s32.totalorder %s22, 1
      %p78 = por %p76, %p77
      %p79 = scmp.ne.s32.totalorder %s68, %s69
      %p80 = scmp.eq.s32.totalorder %s22, 0
      %p81 = por %p79, %p80
      %p82 = scmp.ne.s32.totalorder %s68, %s69
      %p83 = scmp.eq.s32.totalorder %s23, 1
      %p84 = por %p82, %p83
      %p86 = scmp.ne.s32.totalorder %s69, %s85
      %p87 = scmp.eq.s32.totalorder %s23, 0
      %p88 = por %p86, %p87
      %s89 = ssub.s32 %s24, %s36
      %p90 = scmp.eq.s32.totalorder %s89, 0
      %s92 = sadd.s32 %s91, 1
      %s93 = scalar_select %p90, %s91, %s92
      %p96 = pneg %p90
      %p97 = scmp.eq.s32.totalorder %s17, 1
      %p98 = por %p96, %p97
      %p99 = scmp.ne.s32.totalorder %s91, %s94
      %p100 = scmp.eq.s32.totalorder %s17, 0
      %p101 = por %p99, %p100
      %p102 = scmp.ne.s32.totalorder %s91, %s94
      %p103 = scmp.eq.s32.totalorder %s22, 1
      %p104 = por %p102, %p103
      %p105 = scmp.ne.s32.totalorder %s94, %s95
      %p106 = scmp.eq.s32.totalorder %s22, 0
      %p107 = por %p105, %p106
      %p108 = scmp.ne.s32.totalorder %s94, %s95
      %p109 = scmp.eq.s32.totalorder %s23, 1
      %p110 = por %p108, %p109
      %p112 = scmp.ne.s32.totalorder %s95, %s111
      %p113 = scmp.eq.s32.totalorder %s23, 0
      %p114 = por %p112, %p113
      %s115 = ssub.s32 %s24, %s36
      %p116 = scmp.eq.s32.totalorder %s115, 0
      %s118 = sadd.s32 %s117, 1
      %s119 = scalar_select %p116, %s117, %s118
      %p122 = pneg %p116
      %p123 = scmp.eq.s32.totalorder %s17, 1
      %p124 = por %p122, %p123
      %p125 = scmp.ne.s32.totalorder %s117, %s120
      %p126 = scmp.eq.s32.totalorder %s17, 0
      %p127 = por %p125, %p126
      %p128 = scmp.ne.s32.totalorder %s117, %s120
      %p129 = scmp.eq.s32.totalorder %s22, 1
      %p130 = por %p128, %p129
      %p131 = scmp.ne.s32.totalorder %s120, %s121
      %p132 = scmp.eq.s32.totalorder %s22, 0
      %p133 = por %p131, %p132
      %p134 = scmp.ne.s32.totalorder %s120, %s121
      %p135 = scmp.eq.s32.totalorder %s23, 1
      %p136 = por %p134, %p135
      %p138 = scmp.ne.s32.totalorder %s121, %s137
      %p139 = scmp.eq.s32.totalorder %s23, 0
      %p140 = por %p138, %p139
      %s141 = ssub.s32 %s24, %s36
      %s142 = ssub.s32 %s25, %s32
      %s143 = sor.u32 %s141, %s142
      %p144 = scmp.eq.s32.totalorder %s143, 0
      %s146 = sadd.s32 %s145, 1
      %s147 = scalar_select %p144, %s145, %s146
      %p150 = pneg %p144
      %p151 = scmp.eq.s32.totalorder %s17, 1
      %p152 = por %p150, %p151
      %p153 = scmp.ne.s32.totalorder %s145, %s148
      %p154 = scmp.eq.s32.totalorder %s17, 0
      %p155 = por %p153, %p154
      %p156 = scmp.ne.s32.totalorder %s145, %s148
      %p157 = scmp.eq.s32.totalorder %s22, 1
      %p158 = por %p156, %p157
      %p159 = scmp.ne.s32.totalorder %s148, %s149
      %p160 = scmp.eq.s32.totalorder %s22, 0
      %p161 = por %p159, %p160
      %p162 = scmp.ne.s32.totalorder %s148, %s149
      %p163 = scmp.eq.s32.totalorder %s23, 1
      %p164 = por %p162, %p163
      %p166 = scmp.ne.s32.totalorder %s149, %s165
      %p167 = scmp.eq.s32.totalorder %s23, 0
      %p168 = por %p166, %p167
      %s169 = ssub.s32 %s24, %s36
      %s170 = ssub.s32 %s25, %s32
      %s171 = sor.u32 %s169, %s170
      %p172 = scmp.eq.s32.totalorder %s171, 0
      %s174 = sadd.s32 %s173, 1
      %s175 = scalar_select %p172, %s173, %s174
      %p178 = pneg %p172
      %p179 = scmp.eq.s32.totalorder %s17, 1
      %p180 = por %p178, %p179
      %p181 = scmp.ne.s32.totalorder %s173, %s176
      %p182 = scmp.eq.s32.totalorder %s17, 0
      %p183 = por %p181, %p182
      %p184 = scmp.ne.s32.totalorder %s173, %s176
      %p185 = scmp.eq.s32.totalorder %s22, 1
      %p186 = por %p184, %p185
      %p187 = scmp.ne.s32.totalorder %s176, %s177
      %p188 = scmp.eq.s32.totalorder %s22, 0
      %p189 = por %p187, %p188
      %p190 = scmp.ne.s32.totalorder %s176, %s177
      %p191 = scmp.eq.s32.totalorder %s23, 1
      %p192 = por %p190, %p191
      %p194 = scmp.ne.s32.totalorder %s177, %s193
      %p195 = scmp.eq.s32.totalorder %s23, 0
      %p196 = por %p194, %p195
      %p197 = scmp.le.s32.totalorder 1, %s17
      %p198 = scmp.lt.s32.totalorder %s17, 3
      %p199 = pnand %p197, %p198
      %p200 = pneg %p199
      // Predicated region
      $region9: #{tpu_custom_call.1} parent=5 // pred_check
        _
      $region10: #{tpu_custom_call.1} parent=5 // pred_check_branch
        %202 = sbr.rel (%p199) target = $region12
      $region11: #{tpu_custom_call.1} parent=5 // pred_region
        %s203 = ssub.s32 %s17, 1
      $region12: #{tpu_custom_call.1} parent=5 // pred_fallthru
        _
      %p204 = scmp.lt.s32.totalorder %s17, 2
      // Predicated region
      $region13: #{tpu_custom_call.1} parent=5 // pred_check
        %p205 = pneg %p204
      $region14: #{tpu_custom_call.1} parent=5 // pred_check_branch
        %207 = sbr.rel (%p205) target = $region16
      $region15: #{tpu_custom_call.1} parent=5 // pred_region
        // Predicated region
        $region17: #{tpu_custom_call.1} parent=15 // pred_check
          %p208 = pneg %p49
        $region18: #{tpu_custom_call.1} parent=15 // pred_check_branch
          %210 = sbr.rel (%p208) target = $region20
        $region19: #{tpu_custom_call.1} parent=15 // pred_region
          %p211 = scmp.lt.s32.totalorder %s24, 1
          %s212 = scalar_select %p211, %s24, 1
          %s213 = smul.addr %s212, 8
          %s214 = scalar_lea.vmem %s0, %s213
        $region20: #{tpu_custom_call.1} parent=15 // pred_fallthru
          _
        // Predicated region
        $region21: #{tpu_custom_call.1} parent=15 // pred_check
          %p215 = pneg %p75
        $region22: #{tpu_custom_call.1} parent=15 // pred_check_branch
          %217 = sbr.rel (%p215) target = $region24
        $region23: #{tpu_custom_call.1} parent=15 // pred_region
          %p218 = scmp.lt.s32.totalorder %s24, 1
          %s219 = scalar_select %p218, %s24, 1
          %s220 = smul.addr %s219, 8
          %s221 = scalar_lea.vmem %s1, %s220
        $region24: #{tpu_custom_call.1} parent=15 // pred_fallthru
          _
        // Predicated region
        $region25: #{tpu_custom_call.1} parent=15 // pred_check
          %p222 = pneg %p101
        $region26: #{tpu_custom_call.1} parent=15 // pred_check_branch
          %224 = sbr.rel (%p222) target = $region28
        $region27: #{tpu_custom_call.1} parent=15 // pred_region
          %p225 = scmp.lt.s32.totalorder %s24, 1
          %s226 = scalar_select %p225, %s24, 1
          %s227 = smul.addr %s226, 8
          %s228 = scalar_lea.vmem %s2, %s227
        $region28: #{tpu_custom_call.1} parent=15 // pred_fallthru
          _
        // Predicated region
        $region29: #{tpu_custom_call.1} parent=15 // pred_check
          %p229 = pneg %p127
        $region30: #{tpu_custom_call.1} parent=15 // pred_check_branch
          %231 = sbr.rel (%p229) target = $region32
        $region31: #{tpu_custom_call.1} parent=15 // pred_region
          %p232 = scmp.lt.s32.totalorder %s24, 1
          %s233 = scalar_select %p232, %s24, 1
          %s234 = smul.addr %s233, 8
          %s235 = scalar_lea.vmem %s3, %s234
        $region32: #{tpu_custom_call.1} parent=15 // pred_fallthru
          _
        // Predicated region
        $region33: #{tpu_custom_call.1} parent=15 // pred_check
          %p236 = pneg %p155
        $region34: #{tpu_custom_call.1} parent=15 // pred_check_branch
          %238 = sbr.rel (%p236) target = $region36
        $region35: #{tpu_custom_call.1} parent=15 // pred_region
          %s239 = sand.u32 %s145, 1
          %s240 = scalar_lea.sflag [#allocation3], %s239
          %s241 = sand.u32 %s145, 1
          %s242 = smul.addr %s241, 128
          %s243 = scalar_lea.vmem [#allocation2], %s242
          %s244 = smul.u32 16, %s25
          %s246 = ssub.s32 2048, 2048
          %247 = vsyncadd %s240, %s246
          %s248 = smul.addr %s24, 16
          %s249 = sadd.s32 %s244, %s248
          %s250 = smul.addr %s249, 128
          %s251 = scalar_lea.hbm %s4, %s250
          %s253 = sshll.u32 %s243, 4
          %s254 = int_to_ptr.vmem [resolvable:$true] %s253
          %256 = dma.hbm_to_vmem [thread:$0]  %s251, 2048, %s254, %s240
        $region36: #{tpu_custom_call.1} parent=15 // pred_fallthru
          _
      $region16: #{tpu_custom_call.1} parent=5 // pred_fallthru
        _
      %p257 = scmp.le.s32.totalorder 1, %s17
      %p258 = scmp.lt.s32.totalorder %s17, 3
      %p259 = pnand %p257, %p258
      %p260 = pneg %p259
      // Predicated region
      $region37: #{tpu_custom_call.1} parent=5 // pred_check
        _
      $region38: #{tpu_custom_call.1} parent=5 // pred_check_branch
        %262 = sbr.rel (%p259) target = $region40
      $region39: #{tpu_custom_call.1} parent=5 // pred_region
        %s263 = ssub.s32 %s17, 1
        %s264 = sand.u32 %s148, 1
        %s265 = scalar_lea.sflag [#allocation3], %s264
        %s266 = sand.u32 %s148, 1
        %s267 = smul.addr %s266, 128
        %s268 = scalar_lea.vmem [#allocation2], %s267
        // Predicated region
        $region41: #{tpu_custom_call.1} parent=39 // pred_check
          %p269 = pneg %p161
        $region42: #{tpu_custom_call.1} parent=39 // pred_check_branch
          %271 = sbr.rel (%p269) target = $region44
        $region43: #{tpu_custom_call.1} parent=39 // pred_region
          %272 = dma.done %s265, 2048
        $region44: #{tpu_custom_call.1} parent=39 // pred_fallthru
          _
        %p273 = scmp.lt.s32.totalorder %s26, 1
        %s274 = scalar_select %p273, %s26, 1
        %s275 = smul.addr %s274, 8
        %s276 = scalar_lea.vmem %s0, %s275
        %p277 = pneg %p55
        %p278 = pneg %p52
        %p279 = scmp.lt.s32.totalorder %s26, 1
        %s280 = scalar_select %p279, %s26, 1
        %s281 = smul.addr %s280, 8
        %s282 = scalar_lea.vmem %s1, %s281
        %p283 = pneg %p81
        %p284 = pneg %p78
        %p285 = scmp.lt.s32.totalorder %s26, 1
        %s286 = scalar_select %p285, %s26, 1
        %s287 = smul.addr %s286, 8
        %s288 = scalar_lea.vmem %s2, %s287
        %p289 = pneg %p107
        %p290 = pneg %p104
        %p291 = scmp.lt.s32.totalorder %s26, 1
        %s292 = scalar_select %p291, %s26, 1
        %s293 = smul.addr %s292, 8
        %s294 = scalar_lea.vmem %s3, %s293
        %p295 = pneg %p133
        %p296 = pneg %p130
        %s297 = sand.u32 %s148, 1
        %s298 = scalar_lea.sflag [#allocation3], %s297
        %s299 = sand.u32 %s148, 1
        %s300 = smul.addr %s299, 128
        %s301 = scalar_lea.vmem [#allocation2], %s300
        %p302 = pneg %p161
        %p303 = pneg %p158
        %p304 = pneg %p189
        %p305 = pneg %p186
        %s306 = sand.u32 %s176, 1
        %s307 = scalar_lea.sflag [#allocation4], %s306
        %s308 = sand.u32 %s176, 1
        %s309 = smul.addr %s308, 128
        %s310 = scalar_lea.vmem [#allocation5], %s309
        %p311 = scmp.lt.s32.totalorder %s26, 1
        %s312 = scalar_select %p311, %s26, 1
        %s313 = smul.addr %s312, 8
        %s314 = scalar_lea.vmem %s0, %s313
        %p315 = scmp.lt.s32.totalorder %s26, 1
        %s316 = scalar_select %p315, %s26, 1
        %s317 = smul.addr %s316, 8
        %s318 = scalar_lea.vmem %s1, %s317
        %p319 = scmp.lt.s32.totalorder %s26, 1
        %s320 = scalar_select %p319, %s26, 1
        %s321 = smul.addr %s320, 8
        %s322 = scalar_lea.vmem %s2, %s321
        %p323 = scmp.lt.s32.totalorder %s26, 1
        %s324 = scalar_select %p323, %s26, 1
        %s325 = smul.addr %s324, 8
        %s326 = scalar_lea.vmem %s3, %s325
        %s327 = smul.u32 16, %s27
        %s328 = smul.u32 16, %s27
        %v329 = vld [vmem:[%s314] sm:$0xff]
        %v330 = vld [vmem:[%s318] sm:$0xff]
        %v331 = vld [vmem:[%s322] sm:$0xff]
        %v332 = vld [vmem:[%s326] sm:$0xff]
        %v333 = vmul.f32 %v330, 256.0
        %v334 = vcvt.f32.s32.to.zero.pseudo %v333
        %v335 = vcvt.s32.f32 %v334
        %v336 = vsub.f32 %v333, %v335
        %v337 = vmul.f32 %v331, 256.0
        %v338 = vadd.f32 %v336, %v337
        %v339 = vmul.f32 %v338, 6.2831855
        %v340 = vand.u32 2147483647, %v339
        %vm341 = vcmp.le.f32.partialorder %v340, 0.7853982
        %vm342 = vcmp.lt.s32.totalorder %v339, 0
        %v343 = vand.u32 %v339, 2139095040
        %v344 = vshrl.u32 %v343, 23
        %v345 = vsub.s32 %v344, 127
        %v346 = vand.u32 2147483647, %v339
        %v347 = vand.u32 %v346, 8388607
        %v348 = vor.u32 %v347, 8388608
        %v349 = vsub.s32 0, %v348
        %v350 = vadd.s32 %v345, 1
        %vm351 = vcmp.gt.s32.totalorder %v350, 0
        %v352 = vsel %vm351, %v350, 0
        %v353 = vshrl.u32 %v352, 5
        %v354 = vand.u32 %v352, 31
        %v355 = vsub.s32 32, %v354
        %v356 = vshrl.u32 683565275, %v355
        %v357 = vshll.u32 683565275, %v354
        %v358 = vshrl.u32 2475754826, %v355
        %v359 = vor.u32 %v357, %v358
        %v360 = vshll.u32 2475754826, %v354
        %v361 = vshrl.u32 2131351028, %v355
        %v362 = vor.u32 %v360, %v361
        %v363 = vshll.u32 2131351028, %v354
        %v364 = vshrl.u32 2102212464, %v355
        %v365 = vor.u32 %v363, %v364
        %v366 = vshll.u32 2102212464, %v354
        %v367 = vshrl.u32 920167782, %v355
        %v368 = vor.u32 %v366, %v367
        %v369 = vshll.u32 920167782, %v354
        %v370 = vshrl.u32 1326507024, %v355
        %v371 = vor.u32 %v369, %v370
        %vm372 = vcmp.lt.s32.totalorder %v353, 1
        %vm373 = vcmp.lt.s32.totalorder %v353, 2
        %vm374 = vcmp.lt.s32.totalorder %v353, 3
        %vm375 = vcmp.lt.s32.totalorder %v353, 4
        %v376 = vsel %vm372, %v356, %v359
        %v377 = vsel %vm375, %v365, 2102212464
        %v378 = vsel %vm374, %v362, %v377
        %v379 = vsel %vm373, %v376, %v378
        %v380 = vsel %vm372, %v359, %v362
        %v381 = vsel %vm375, %v368, 920167782
        %v382 = vsel %vm374, %v365, %v381
        %v383 = vsel %vm373, %v380, %v382
        %v384 = vsel %vm372, %v362, %v365
        %v385 = vsel %vm375, %v371, 1326507024
        %v386 = vsel %vm374, %v368, %v385
        %v387 = vsel %vm373, %v384, %v386
        %v388 = vshll.u32 %v348, 8
        %v389 = vmul.u32.u64.compose %v388, %v387
        %v390 = vextract.low.u32 %v389
        %v391 = vextract.high.u32 %v389
        %v392 = vmul.u32.u64.compose %v388, %v383
        %v393 = vextract.low.u32 %v392
        %v394 = vextract.high.u32 %v392
        %v395 = vmul.u32 %v388, %v379
        %v396 = vadd.s32 %v391, %v393
        %vm397 = vc.u32 %v391, %v393
        %v398 = vadd.s32 %v394, 1
        %v399 = vsel %vm397, %v398, %v394
        %v400 = vadd.s32 %v395, %v399
        %v401 = vadd.s32 %v400, 536870912
        %v402 = vshrl.u32 %v401, 30
        %v403 = vshll.u32 %v402, 30
        %v404 = vsub.s32 %v400, %v403
        %vm405 = vcmp.lt.s32.totalorder %v404, 0
        %v406 = vsub.s32 0, %v404
        %v407 = vsel %vm405, %v406, %v404
        %v408 = vclz %v407
        %v409 = vsub.s32 %v408, 2
        %vm410 = vcmp.gt.s32.totalorder 0, %v409
        %v411 = vsel %vm410, 0, %v409
        %v412 = vsub.s32 32, %v411
        %v413 = vshll.u32 %v404, %v411
        %v414 = vshrl.u32 %v396, %v412
        %v415 = vor.u32 %v413, %v414
        %v416 = vsub.s32 4294967266, %v411
        %v417 = vadd.s32 %v416, 127
        %v418 = vshll.u32 %v417, 23
        %v419 = vor.u32 4788187, %v418
        %v420 = vand.u32 2147483647, %v419
        %v422 = vcvt.s32.f32 %v415
        %v423 = vmul.f32 %v422, %v420
        %v424 = vxor.u32 %v423, 2147483648
        %v425 = vsel %vm342, %v424, %v423
        %v426 = vsub.s32 4, %v402
        %v427 = vsel %vm342, %v426, %v402
        %v428 = vsel %vm341, %v339, %v425
        %v429 = vsel %vm341, 0, %v427
        %v430 = vcosq.f32.pop %v428
        %v431 = vsinq.f32.pop %v428
        %vm432 = vweird.f32 %v339
        %v433 = vand.u32 %v429, 3
        %vm434 = vcmp.lt.s32.totalorder %v433, 2
        %vm435 = vcmp.eq.s32.totalorder %v433, 0
        %v436 = vxor.u32 %v431, 2147483648
        %v437 = vsel %vm435, %v430, %v436
        %vm438 = vcmp.eq.s32.totalorder %v433, 2
        %v439 = vxor.u32 %v430, 2147483648
        %v440 = vsel %vm438, %v439, %v431
        %v441 = vsel %vm434, %v437, %v440
        %v442 = vsel %vm432, nan, %v441
        %v443 = vand.u32 2147483647, %v339
        %vm444 = vcmp.le.f32.partialorder %v443, 0.7853982
        %vm445 = vcmp.lt.s32.totalorder %v339, 0
        %v446 = vand.u32 %v339, 2139095040
        %v447 = vshrl.u32 %v446, 23
        %v448 = vsub.s32 %v447, 127
        %v449 = vand.u32 2147483647, %v339
        %v450 = vand.u32 %v449, 8388607
        %v451 = vor.u32 %v450, 8388608
        %v452 = vsub.s32 0, %v451
        %v453 = vadd.s32 %v448, 1
        %vm454 = vcmp.gt.s32.totalorder %v453, 0
        %v455 = vsel %vm454, %v453, 0
        %v456 = vshrl.u32 %v455, 5
        %v457 = vand.u32 %v455, 31
        %v458 = vsub.s32 32, %v457
        %v459 = vshrl.u32 683565275, %v458
        %v460 = vshll.u32 683565275, %v457
        %v461 = vshrl.u32 2475754826, %v458
        %v462 = vor.u32 %v460, %v461
        %v463 = vshll.u32 2475754826, %v457
        %v464 = vshrl.u32 2131351028, %v458
        %v465 = vor.u32 %v463, %v464
        %v466 = vshll.u32 2131351028, %v457
        %v467 = vshrl.u32 2102212464, %v458
        %v468 = vor.u32 %v466, %v467
        %v469 = vshll.u32 2102212464, %v457
        %v470 = vshrl.u32 920167782, %v458
        %v471 = vor.u32 %v469, %v470
        %v472 = vshll.u32 920167782, %v457
        %v473 = vshrl.u32 1326507024, %v458
        %v474 = vor.u32 %v472, %v473
        %vm475 = vcmp.lt.s32.totalorder %v456, 1
        %vm476 = vcmp.lt.s32.totalorder %v456, 2
        %vm477 = vcmp.lt.s32.totalorder %v456, 3
        %vm478 = vcmp.lt.s32.totalorder %v456, 4
        %v479 = vsel %vm475, %v459, %v462
        %v480 = vsel %vm478, %v468, 2102212464
        %v481 = vsel %vm477, %v465, %v480
        %v482 = vsel %vm476, %v479, %v481
        %v483 = vsel %vm475, %v462, %v465
        %v484 = vsel %vm478, %v471, 920167782
        %v485 = vsel %vm477, %v468, %v484
        %v486 = vsel %vm476, %v483, %v485
        %v487 = vsel %vm475, %v465, %v468
        %v488 = vsel %vm478, %v474, 1326507024
        %v489 = vsel %vm477, %v471, %v488
        %v490 = vsel %vm476, %v487, %v489
        %v491 = vshll.u32 %v451, 8
        %v492 = vmul.u32.u64.compose %v491, %v490
        %v493 = vextract.low.u32 %v492
        %v494 = vextract.high.u32 %v492
        %v495 = vmul.u32.u64.compose %v491, %v486
        %v496 = vextract.low.u32 %v495
        %v497 = vextract.high.u32 %v495
        %v498 = vmul.u32 %v491, %v482
        %v499 = vadd.s32 %v494, %v496
        %vm500 = vc.u32 %v494, %v496
        %v501 = vadd.s32 %v497, 1
        %v502 = vsel %vm500, %v501, %v497
        %v503 = vadd.s32 %v498, %v502
        %v504 = vadd.s32 %v503, 536870912
        %v505 = vshrl.u32 %v504, 30
        %v506 = vshll.u32 %v505, 30
        %v507 = vsub.s32 %v503, %v506
        %vm508 = vcmp.lt.s32.totalorder %v507, 0
        %v509 = vsub.s32 0, %v507
        %v510 = vsel %vm508, %v509, %v507
        %v511 = vclz %v510
        %v512 = vsub.s32 %v511, 2
        %vm513 = vcmp.gt.s32.totalorder 0, %v512
        %v514 = vsel %vm513, 0, %v512
        %v515 = vsub.s32 32, %v514
        %v516 = vshll.u32 %v507, %v514
        %v517 = vshrl.u32 %v499, %v515
        %v518 = vor.u32 %v516, %v517
        %v519 = vsub.s32 4294967266, %v514
        %v520 = vadd.s32 %v519, 127
        %v521 = vshll.u32 %v520, 23
        %v522 = vor.u32 4788187, %v521
        %v523 = vand.u32 2147483647, %v522
        %v525 = vcvt.s32.f32 %v518
        %v526 = vmul.f32 %v525, %v523
        %v527 = vxor.u32 %v526, 2147483648
        %v528 = vsel %vm445, %v527, %v526
        %v529 = vsub.s32 4, %v505
        %v530 = vsel %vm445, %v529, %v505
        %v531 = vsel %vm444, %v339, %v528
        %v532 = vsel %vm444, 0, %v530
        %v533 = vcosq.f32.pop %v531
        %v534 = vsinq.f32.pop %v531
        %vm535 = vweird.f32 %v339
        %v536 = vadd.s32 %v532, 3
        %v537 = vand.u32 %v536, 3
        %vm538 = vcmp.lt.s32.totalorder %v537, 2
        %vm539 = vcmp.eq.s32.totalorder %v537, 0
        %v540 = vxor.u32 %v534, 2147483648
        %v541 = vsel %vm539, %v533, %v540
        %vm542 = vcmp.eq.s32.totalorder %v537, 2
        %v543 = vxor.u32 %v533, 2147483648
        %v544 = vsel %vm542, %v543, %v534
        %v545 = vsel %vm538, %v541, %v544
        %v546 = vsel %vm535, nan, %v545
        %v547 = vlaneseq
        %v548 = vand.u32 %v547, 127
        %v549 = vadd.s32 %v548, 128
        %s550 = smul.u32 %s27, 2048
        %v551 = vstv %s550
        %v552 = vadd.s32 %v548, %v551
        %v553 = vadd.s32 %v549, %v551
        %v554 = vcvt.s32.f32 %v552
        %v555 = vcvt.s32.f32 %v553
        %557 = vset.pattern.permute.xlu0 0
        %558 = vperm.xlu0 %557, %v330
        %v559 = vpop.permute.xlu0 %558
        %v561 = vmul.f32 %v559, %v554
        %v562 = vmul.f32 %v559, %v555
        %v563 = vcvt.f32.s32.to.zero.pseudo %v561
        %v564 = vcvt.f32.s32.to.zero.pseudo %v562
        %v565 = vcvt.s32.f32 %v563
        %v566 = vcvt.s32.f32 %v564
        %v567 = vsub.f32 %v561, %v565
        %v568 = vsub.f32 %v562, %v566
        %570 = vset.pattern.permute.xlu0 0
        %571 = vperm.xlu0 %570, %v331
        %v572 = vpop.permute.xlu0 %571
        %v574 = vmul.f32 %v572, %v554
        %v575 = vmul.f32 %v572, %v555
        %v576 = vadd.f32 %v567, %v574
        %v577 = vadd.f32 %v568, %v575
        %v578 = vmul.f32 %v576, 6.2831855
        %v579 = vmul.f32 %v577, 6.2831855
        %581 = vset.pattern.permute.xlu0 0
        %582 = vperm.xlu0 %581, %v332
        %v583 = vpop.permute.xlu0 %582
        %v585 = vadd.f32 %v578, %v583
        %v586 = vadd.f32 %v579, %v583
        %v587 = vand.u32 2147483647, %v585
        %vm588 = vcmp.le.f32.partialorder %v587, 0.7853982
        %vm589 = vcmp.lt.s32.totalorder %v585, 0
        %v590 = vand.u32 %v585, 2139095040
        %v591 = vshrl.u32 %v590, 23
        %v592 = vsub.s32 %v591, 127
        %v593 = vand.u32 2147483647, %v585
        %v594 = vand.u32 %v593, 8388607
        %v595 = vor.u32 %v594, 8388608
        %v596 = vsub.s32 0, %v595
        %v597 = vadd.s32 %v592, 1
        %vm598 = vcmp.gt.s32.totalorder %v597, 0
        %v599 = vsel %vm598, %v597, 0
        %v600 = vshrl.u32 %v599, 5
        %v601 = vand.u32 %v599, 31
        %v602 = vsub.s32 32, %v601
        %v603 = vshrl.u32 683565275, %v602
        %v604 = vshll.u32 683565275, %v601
        %v605 = vshrl.u32 2475754826, %v602
        %v606 = vor.u32 %v604, %v605
        %v607 = vshll.u32 2475754826, %v601
        %v608 = vshrl.u32 2131351028, %v602
        %v609 = vor.u32 %v607, %v608
        %v610 = vshll.u32 2131351028, %v601
        %v611 = vshrl.u32 2102212464, %v602
        %v612 = vor.u32 %v610, %v611
        %v613 = vshll.u32 2102212464, %v601
        %v614 = vshrl.u32 920167782, %v602
        %v615 = vor.u32 %v613, %v614
        %v616 = vshll.u32 920167782, %v601
        %v617 = vshrl.u32 1326507024, %v602
        %v618 = vor.u32 %v616, %v617
        %vm619 = vcmp.lt.s32.totalorder %v600, 1
        %vm620 = vcmp.lt.s32.totalorder %v600, 2
        %vm621 = vcmp.lt.s32.totalorder %v600, 3
        %vm622 = vcmp.lt.s32.totalorder %v600, 4
        %v623 = vsel %vm619, %v603, %v606
        %v624 = vsel %vm622, %v612, 2102212464
        %v625 = vsel %vm621, %v609, %v624
        %v626 = vsel %vm620, %v623, %v625
        %v627 = vsel %vm619, %v606, %v609
        %v628 = vsel %vm622, %v615, 920167782
        %v629 = vsel %vm621, %v612, %v628
        %v630 = vsel %vm620, %v627, %v629
        %v631 = vsel %vm619, %v609, %v612
        %v632 = vsel %vm622, %v618, 1326507024
        %v633 = vsel %vm621, %v615, %v632
        %v634 = vsel %vm620, %v631, %v633
        %v635 = vshll.u32 %v595, 8
        %v636 = vmul.u32.u64.compose %v635, %v634
        %v637 = vextract.low.u32 %v636
        %v638 = vextract.high.u32 %v636
        %v639 = vmul.u32.u64.compose %v635, %v630
        %v640 = vextract.low.u32 %v639
        %v641 = vextract.high.u32 %v639
        %v642 = vmul.u32 %v635, %v626
        %v643 = vadd.s32 %v638, %v640
        %vm644 = vc.u32 %v638, %v640
        %v645 = vadd.s32 %v641, 1
        %v646 = vsel %vm644, %v645, %v641
        %v647 = vadd.s32 %v642, %v646
        %v648 = vadd.s32 %v647, 536870912
        %v649 = vshrl.u32 %v648, 30
        %v650 = vshll.u32 %v649, 30
        %v651 = vsub.s32 %v647, %v650
        %vm652 = vcmp.lt.s32.totalorder %v651, 0
        %v653 = vsub.s32 0, %v651
        %v654 = vsel %vm652, %v653, %v651
        %v655 = vclz %v654
        %v656 = vsub.s32 %v655, 2
        %vm657 = vcmp.gt.s32.totalorder 0, %v656
        %v658 = vsel %vm657, 0, %v656
        %v659 = vsub.s32 32, %v658
        %v660 = vshll.u32 %v651, %v658
        %v661 = vshrl.u32 %v643, %v659
        %v662 = vor.u32 %v660, %v661
        %v663 = vsub.s32 4294967266, %v658
        %v664 = vadd.s32 %v663, 127
        %v665 = vshll.u32 %v664, 23
        %v666 = vor.u32 4788187, %v665
        %v667 = vand.u32 2147483647, %v666
        %v669 = vcvt.s32.f32 %v662
        %v670 = vmul.f32 %v669, %v667
        %v671 = vxor.u32 %v670, 2147483648
        %v672 = vsel %vm589, %v671, %v670
        %v673 = vsub.s32 4, %v649
        %v674 = vsel %vm589, %v673, %v649
        %v675 = vsel %vm588, %v585, %v672
        %v676 = vsel %vm588, 0, %v674
        %v677 = vcosq.f32.pop %v675
        %v678 = vsinq.f32.pop %v675
        %vm679 = vweird.f32 %v585
        %v680 = vand.u32 %v676, 3
        %vm681 = vcmp.lt.s32.totalorder %v680, 2
        %vm682 = vcmp.eq.s32.totalorder %v680, 0
        %v683 = vxor.u32 %v678, 2147483648
        %v684 = vsel %vm682, %v677, %v683
        %vm685 = vcmp.eq.s32.totalorder %v680, 2
        %v686 = vxor.u32 %v677, 2147483648
        %v687 = vsel %vm685, %v686, %v678
        %v688 = vsel %vm681, %v684, %v687
        %v689 = vsel %vm679, nan, %v688
        %v690 = vand.u32 2147483647, %v586
        %vm691 = vcmp.le.f32.partialorder %v690, 0.7853982
        %vm692 = vcmp.lt.s32.totalorder %v586, 0
        %v693 = vand.u32 %v586, 2139095040
        %v694 = vshrl.u32 %v693, 23
        %v695 = vsub.s32 %v694, 127
        %v696 = vand.u32 2147483647, %v586
        %v697 = vand.u32 %v696, 8388607
        %v698 = vor.u32 %v697, 8388608
        %v699 = vsub.s32 0, %v698
        %v700 = vadd.s32 %v695, 1
        %vm701 = vcmp.gt.s32.totalorder %v700, 0
        %v702 = vsel %vm701, %v700, 0
        %v703 = vshrl.u32 %v702, 5
        %v704 = vand.u32 %v702, 31
        %v705 = vsub.s32 32, %v704
        %v706 = vshrl.u32 683565275, %v705
        %v707 = vshll.u32 683565275, %v704
        %v708 = vshrl.u32 2475754826, %v705
        %v709 = vor.u32 %v707, %v708
        %v710 = vshll.u32 2475754826, %v704
        %v711 = vshrl.u32 2131351028, %v705
        %v712 = vor.u32 %v710, %v711
        %v713 = vshll.u32 2131351028, %v704
        %v714 = vshrl.u32 2102212464, %v705
        %v715 = vor.u32 %v713, %v714
        %v716 = vshll.u32 2102212464, %v704
        %v717 = vshrl.u32 920167782, %v705
        %v718 = vor.u32 %v716, %v717
        %v719 = vshll.u32 920167782, %v704
        %v720 = vshrl.u32 1326507024, %v705
        %v721 = vor.u32 %v719, %v720
        %vm722 = vcmp.lt.s32.totalorder %v703, 1
        %vm723 = vcmp.lt.s32.totalorder %v703, 2
        %vm724 = vcmp.lt.s32.totalorder %v703, 3
        %vm725 = vcmp.lt.s32.totalorder %v703, 4
        %v726 = vsel %vm722, %v706, %v709
        %v727 = vsel %vm725, %v715, 2102212464
        %v728 = vsel %vm724, %v712, %v727
        %v729 = vsel %vm723, %v726, %v728
        %v730 = vsel %vm722, %v709, %v712
        %v731 = vsel %vm725, %v718, 920167782
        %v732 = vsel %vm724, %v715, %v731
        %v733 = vsel %vm723, %v730, %v732
        %v734 = vsel %vm722, %v712, %v715
        %v735 = vsel %vm725, %v721, 1326507024
        %v736 = vsel %vm724, %v718, %v735
        %v737 = vsel %vm723, %v734, %v736
        %v738 = vshll.u32 %v698, 8
        %v739 = vmul.u32.u64.compose %v738, %v737
        %v740 = vextract.low.u32 %v739
        %v741 = vextract.high.u32 %v739
        %v742 = vmul.u32.u64.compose %v738, %v733
        %v743 = vextract.low.u32 %v742
        %v744 = vextract.high.u32 %v742
        %v745 = vmul.u32 %v738, %v729
        %v746 = vadd.s32 %v741, %v743
        %vm747 = vc.u32 %v741, %v743
        %v748 = vadd.s32 %v744, 1
        %v749 = vsel %vm747, %v748, %v744
        %v750 = vadd.s32 %v745, %v749
        %v751 = vadd.s32 %v750, 536870912
        %v752 = vshrl.u32 %v751, 30
        %v753 = vshll.u32 %v752, 30
        %v754 = vsub.s32 %v750, %v753
        %vm755 = vcmp.lt.s32.totalorder %v754, 0
        %v756 = vsub.s32 0, %v754
        %v757 = vsel %vm755, %v756, %v754
        %v758 = vclz %v757
        %v759 = vsub.s32 %v758, 2
        %vm760 = vcmp.gt.s32.totalorder 0, %v759
        %v761 = vsel %vm760, 0, %v759
        %v762 = vsub.s32 32, %v761
        %v763 = vshll.u32 %v754, %v761
        %v764 = vshrl.u32 %v746, %v762
        %v765 = vor.u32 %v763, %v764
        %v766 = vsub.s32 4294967266, %v761
        %v767 = vadd.s32 %v766, 127
        %v768 = vshll.u32 %v767, 23
        %v769 = vor.u32 4788187, %v768
        %v770 = vand.u32 2147483647, %v769
        %v772 = vcvt.s32.f32 %v765
        %v773 = vmul.f32 %v772, %v770
        %v774 = vxor.u32 %v773, 2147483648
        %v775 = vsel %vm692, %v774, %v773
        %v776 = vsub.s32 4, %v752
        %v777 = vsel %vm692, %v776, %v752
        %v778 = vsel %vm691, %v586, %v775
        %v779 = vsel %vm691, 0, %v777
        %v780 = vcosq.f32.pop %v778
        %v781 = vsinq.f32.pop %v778
        %vm782 = vweird.f32 %v586
        %v783 = vand.u32 %v779, 3
        %vm784 = vcmp.lt.s32.totalorder %v783, 2
        %vm785 = vcmp.eq.s32.totalorder %v783, 0
        %v786 = vxor.u32 %v781, 2147483648
        %v787 = vsel %vm785, %v780, %v786
        %vm788 = vcmp.eq.s32.totalorder %v783, 2
        %v789 = vxor.u32 %v780, 2147483648
        %v790 = vsel %vm788, %v789, %v781
        %v791 = vsel %vm784, %v787, %v790
        %v792 = vsel %vm782, nan, %v791
        %v793 = vand.u32 2147483647, %v585
        %vm794 = vcmp.le.f32.partialorder %v793, 0.7853982
        %vm795 = vcmp.lt.s32.totalorder %v585, 0
        %v796 = vand.u32 %v585, 2139095040
        %v797 = vshrl.u32 %v796, 23
        %v798 = vsub.s32 %v797, 127
        %v799 = vand.u32 2147483647, %v585
        %v800 = vand.u32 %v799, 8388607
        %v801 = vor.u32 %v800, 8388608
        %v802 = vsub.s32 0, %v801
        %v803 = vadd.s32 %v798, 1
        %vm804 = vcmp.gt.s32.totalorder %v803, 0
        %v805 = vsel %vm804, %v803, 0
        %v806 = vshrl.u32 %v805, 5
        %v807 = vand.u32 %v805, 31
        %v808 = vsub.s32 32, %v807
        %v809 = vshrl.u32 683565275, %v808
        %v810 = vshll.u32 683565275, %v807
        %v811 = vshrl.u32 2475754826, %v808
        %v812 = vor.u32 %v810, %v811
        %v813 = vshll.u32 2475754826, %v807
        %v814 = vshrl.u32 2131351028, %v808
        %v815 = vor.u32 %v813, %v814
        %v816 = vshll.u32 2131351028, %v807
        %v817 = vshrl.u32 2102212464, %v808
        %v818 = vor.u32 %v816, %v817
        %v819 = vshll.u32 2102212464, %v807
        %v820 = vshrl.u32 920167782, %v808
        %v821 = vor.u32 %v819, %v820
        %v822 = vshll.u32 920167782, %v807
        %v823 = vshrl.u32 1326507024, %v808
        %v824 = vor.u32 %v822, %v823
        %vm825 = vcmp.lt.s32.totalorder %v806, 1
        %vm826 = vcmp.lt.s32.totalorder %v806, 2
        %vm827 = vcmp.lt.s32.totalorder %v806, 3
        %vm828 = vcmp.lt.s32.totalorder %v806, 4
        %v829 = vsel %vm825, %v809, %v812
        %v830 = vsel %vm828, %v818, 2102212464
        %v831 = vsel %vm827, %v815, %v830
        %v832 = vsel %vm826, %v829, %v831
        %v833 = vsel %vm825, %v812, %v815
        %v834 = vsel %vm828, %v821, 920167782
        %v835 = vsel %vm827, %v818, %v834
        %v836 = vsel %vm826, %v833, %v835
        %v837 = vsel %vm825, %v815, %v818
        %v838 = vsel %vm828, %v824, 1326507024
        %v839 = vsel %vm827, %v821, %v838
        %v840 = vsel %vm826, %v837, %v839
        %v841 = vshll.u32 %v801, 8
        %v842 = vmul.u32.u64.compose %v841, %v840
        %v843 = vextract.low.u32 %v842
        %v844 = vextract.high.u32 %v842
        %v845 = vmul.u32.u64.compose %v841, %v836
        %v846 = vextract.low.u32 %v845
        %v847 = vextract.high.u32 %v845
        %v848 = vmul.u32 %v841, %v832
        %v849 = vadd.s32 %v844, %v846
        %vm850 = vc.u32 %v844, %v846
        %v851 = vadd.s32 %v847, 1
        %v852 = vsel %vm850, %v851, %v847
        %v853 = vadd.s32 %v848, %v852
        %v854 = vadd.s32 %v853, 536870912
        %v855 = vshrl.u32 %v854, 30
        %v856 = vshll.u32 %v855, 30
        %v857 = vsub.s32 %v853, %v856
        %vm858 = vcmp.lt.s32.totalorder %v857, 0
        %v859 = vsub.s32 0, %v857
        %v860 = vsel %vm858, %v859, %v857
        %v861 = vclz %v860
        %v862 = vsub.s32 %v861, 2
        %vm863 = vcmp.gt.s32.totalorder 0, %v862
        %v864 = vsel %vm863, 0, %v862
        %v865 = vsub.s32 32, %v864
        %v866 = vshll.u32 %v857, %v864
        %v867 = vshrl.u32 %v849, %v865
        %v868 = vor.u32 %v866, %v867
        %v869 = vsub.s32 4294967266, %v864
        %v870 = vadd.s32 %v869, 127
        %v871 = vshll.u32 %v870, 23
        %v872 = vor.u32 4788187, %v871
        %v873 = vand.u32 2147483647, %v872
        %v875 = vcvt.s32.f32 %v868
        %v876 = vmul.f32 %v875, %v873
        %v877 = vxor.u32 %v876, 2147483648
        %v878 = vsel %vm795, %v877, %v876
        %v879 = vsub.s32 4, %v855
        %v880 = vsel %vm795, %v879, %v855
        %v881 = vsel %vm794, %v585, %v878
        %v882 = vsel %vm794, 0, %v880
        %v883 = vcosq.f32.pop %v881
        %v884 = vsinq.f32.pop %v881
        %vm885 = vweird.f32 %v585
        %v886 = vadd.s32 %v882, 3
        %v887 = vand.u32 %v886, 3
        %vm888 = vcmp.lt.s32.totalorder %v887, 2
        %vm889 = vcmp.eq.s32.totalorder %v887, 0
        %v890 = vxor.u32 %v884, 2147483648
        %v891 = vsel %vm889, %v883, %v890
        %vm892 = vcmp.eq.s32.totalorder %v887, 2
        %v893 = vxor.u32 %v883, 2147483648
        %v894 = vsel %vm892, %v893, %v884
        %v895 = vsel %vm888, %v891, %v894
        %v896 = vsel %vm885, nan, %v895
        %v897 = vand.u32 2147483647, %v586
        %vm898 = vcmp.le.f32.partialorder %v897, 0.7853982
        %vm899 = vcmp.lt.s32.totalorder %v586, 0
        %v900 = vand.u32 %v586, 2139095040
        %v901 = vshrl.u32 %v900, 23
        %v902 = vsub.s32 %v901, 127
        %v903 = vand.u32 2147483647, %v586
        %v904 = vand.u32 %v903, 8388607
        %v905 = vor.u32 %v904, 8388608
        %v906 = vsub.s32 0, %v905
        %v907 = vadd.s32 %v902, 1
        %vm908 = vcmp.gt.s32.totalorder %v907, 0
        %v909 = vsel %vm908, %v907, 0
        %v910 = vshrl.u32 %v909, 5
        %v911 = vand.u32 %v909, 31
        %v912 = vsub.s32 32, %v911
        %v913 = vshrl.u32 683565275, %v912
        %v914 = vshll.u32 683565275, %v911
        %v915 = vshrl.u32 2475754826, %v912
        %v916 = vor.u32 %v914, %v915
        %v917 = vshll.u32 2475754826, %v911
        %v918 = vshrl.u32 2131351028, %v912
        %v919 = vor.u32 %v917, %v918
        %v920 = vshll.u32 2131351028, %v911
        %v921 = vshrl.u32 2102212464, %v912
        %v922 = vor.u32 %v920, %v921
        %v923 = vshll.u32 2102212464, %v911
        %v924 = vshrl.u32 920167782, %v912
        %v925 = vor.u32 %v923, %v924
        %v926 = vshll.u32 920167782, %v911
        %v927 = vshrl.u32 1326507024, %v912
        %v928 = vor.u32 %v926, %v927
        %vm929 = vcmp.lt.s32.totalorder %v910, 1
        %vm930 = vcmp.lt.s32.totalorder %v910, 2
        %vm931 = vcmp.lt.s32.totalorder %v910, 3
        %vm932 = vcmp.lt.s32.totalorder %v910, 4
        %v933 = vsel %vm929, %v913, %v916
        %v934 = vsel %vm932, %v922, 2102212464
        %v935 = vsel %vm931, %v919, %v934
        %v936 = vsel %vm930, %v933, %v935
        %v937 = vsel %vm929, %v916, %v919
        %v938 = vsel %vm932, %v925, 920167782
        %v939 = vsel %vm931, %v922, %v938
        %v940 = vsel %vm930, %v937, %v939
        %v941 = vsel %vm929, %v919, %v922
        %v942 = vsel %vm932, %v928, 1326507024
        %v943 = vsel %vm931, %v925, %v942
        %v944 = vsel %vm930, %v941, %v943
        %v945 = vshll.u32 %v905, 8
        %v946 = vmul.u32.u64.compose %v945, %v944
        %v947 = vextract.low.u32 %v946
        %v948 = vextract.high.u32 %v946
        %v949 = vmul.u32.u64.compose %v945, %v940
        %v950 = vextract.low.u32 %v949
        %v951 = vextract.high.u32 %v949
        %v952 = vmul.u32 %v945, %v936
        %v953 = vadd.s32 %v948, %v950
        %vm954 = vc.u32 %v948, %v950
        %v955 = vadd.s32 %v951, 1
        %v956 = vsel %vm954, %v955, %v951
        %v957 = vadd.s32 %v952, %v956
        %v958 = vadd.s32 %v957, 536870912
        %v959 = vshrl.u32 %v958, 30
        %v960 = vshll.u32 %v959, 30
        %v961 = vsub.s32 %v957, %v960
        %vm962 = vcmp.lt.s32.totalorder %v961, 0
        %v963 = vsub.s32 0, %v961
        %v964 = vsel %vm962, %v963, %v961
        %v965 = vclz %v964
        %v966 = vsub.s32 %v965, 2
        %vm967 = vcmp.gt.s32.totalorder 0, %v966
        %v968 = vsel %vm967, 0, %v966
        %v969 = vsub.s32 32, %v968
        %v970 = vshll.u32 %v961, %v968
        %v971 = vshrl.u32 %v953, %v969
        %v972 = vor.u32 %v970, %v971
        %v973 = vsub.s32 4294967266, %v968
        %v974 = vadd.s32 %v973, 127
        %v975 = vshll.u32 %v974, 23
        %v976 = vor.u32 4788187, %v975
        %v977 = vand.u32 2147483647, %v976
        %v979 = vcvt.s32.f32 %v972
        %v980 = vmul.f32 %v979, %v977
        %v981 = vxor.u32 %v980, 2147483648
        %v982 = vsel %vm899, %v981, %v980
        %v983 = vsub.s32 4, %v959
        %v984 = vsel %vm899, %v983, %v959
        %v985 = vsel %vm898, %v586, %v982
        %v986 = vsel %vm898, 0, %v984
        %v987 = vcosq.f32.pop %v985
        %v988 = vsinq.f32.pop %v985
        %vm989 = vweird.f32 %v586
        %v990 = vadd.s32 %v986, 3
        %v991 = vand.u32 %v990, 3
        %vm992 = vcmp.lt.s32.totalorder %v991, 2
        %vm993 = vcmp.eq.s32.totalorder %v991, 0
        %v994 = vxor.u32 %v988, 2147483648
        %v995 = vsel %vm993, %v987, %v994
        %vm996 = vcmp.eq.s32.totalorder %v991, 2
        %v997 = vxor.u32 %v987, 2147483648
        %v998 = vsel %vm996, %v997, %v988
        %v999 = vsel %vm992, %v995, %v998
        %v1000 = vsel %vm989, nan, %v999
        %v1001 = vld [vmem:[%s268] sm:$0xff]
        %v1002 = vld [vmem:[%s268 + $0x8] sm:$0xff]
        %1004 = vset.pattern.permute.xlu0 0
        %1005 = vperm.xlu0 %1004, %v329
        %v1006 = vpop.permute.xlu0 %1005
        %v1008 = vmul.f32 %v1006, %v689
        %v1009 = vmul.f32 %v1006, %v792
        %v1010 = vsub.f32 %v1001, %v1008
        %v1011 = vsub.f32 %v1002, %v1009
        %v1012 = vmul.f32 %v1010, 10.0
        %v1013 = vmul.f32 %v1011, 10.0
        %1014 = vst [vmem:[%s310] sm:$0xff] %v1012
        %1015 = vst [vmem:[%s310 + $0x8] sm:$0xff] %v1013
        %1017 = vset.pattern.permute.xlu0 0
        %1018 = vperm.xlu0 %1017, %v442
        %v1019 = vpop.permute.xlu0 %1018
        %v1021 = vmul.f32 %v689, %v1019
        %v1022 = vmul.f32 %v792, %v1019
        %1024 = vset.pattern.permute.xlu0 0
        %1025 = vperm.xlu0 %1024, %v546
        %v1026 = vpop.permute.xlu0 %1025
        %v1028 = vmul.f32 %v896, %v1026
        %v1029 = vmul.f32 %v1000, %v1026
        %v1030 = vsub.f32 %v1021, %v1028
        %v1031 = vsub.f32 %v1022, %v1029
        %v1032 = vmul.f32 %v896, %v1019
        %v1033 = vmul.f32 %v1000, %v1019
        %v1034 = vmul.f32 %v689, %v1026
        %v1035 = vmul.f32 %v792, %v1026
        %v1036 = vadd.f32 %v1032, %v1034
        %v1037 = vadd.f32 %v1033, %v1035
        %v1038 = vld [vmem:[%s268 + $0x10] sm:$0xff]
        %v1039 = vld [vmem:[%s268 + $0x18] sm:$0xff]
        %v1040 = vmul.f32 %v1006, %v1030
        %v1041 = vmul.f32 %v1006, %v1031
        %v1042 = vsub.f32 %v1038, %v1040
        %v1043 = vsub.f32 %v1039, %v1041
        %v1044 = vmul.f32 %v1042, 10.0
        %v1045 = vmul.f32 %v1043, 10.0
        %1046 = vst [vmem:[%s310 + $0x10] sm:$0xff] %v1044
        %1047 = vst [vmem:[%s310 + $0x18] sm:$0xff] %v1045
        %v1048 = vmul.f32 %v1030, %v1019
        %v1049 = vmul.f32 %v1031, %v1019
        %v1050 = vmul.f32 %v1036, %v1026
        %v1051 = vmul.f32 %v1037, %v1026
        %v1052 = vsub.f32 %v1048, %v1050
        %v1053 = vsub.f32 %v1049, %v1051
        %v1054 = vmul.f32 %v1036, %v1019
        %v1055 = vmul.f32 %v1037, %v1019
        %v1056 = vmul.f32 %v1030, %v1026
        %v1057 = vmul.f32 %v1031, %v1026
        %v1058 = vadd.f32 %v1054, %v1056
        %v1059 = vadd.f32 %v1055, %v1057
        %v1060 = vld [vmem:[%s268 + $0x20] sm:$0xff]
        %v1061 = vld [vmem:[%s268 + $0x28] sm:$0xff]
        %v1062 = vmul.f32 %v1006, %v1052
        %v1063 = vmul.f32 %v1006, %v1053
        %v1064 = vsub.f32 %v1060, %v1062
        %v1065 = vsub.f32 %v1061, %v1063
        %v1066 = vmul.f32 %v1064, 10.0
        %v1067 = vmul.f32 %v1065, 10.0
        %1068 = vst [vmem:[%s310 + $0x20] sm:$0xff] %v1066
        %1069 = vst [vmem:[%s310 + $0x28] sm:$0xff] %v1067
        %v1070 = vmul.f32 %v1052, %v1019
        %v1071 = vmul.f32 %v1053, %v1019
        %v1072 = vmul.f32 %v1058, %v1026
        %v1073 = vmul.f32 %v1059, %v1026
        %v1074 = vsub.f32 %v1070, %v1072
        %v1075 = vsub.f32 %v1071, %v1073
        %v1076 = vmul.f32 %v1058, %v1019
        %v1077 = vmul.f32 %v1059, %v1019
        %v1078 = vmul.f32 %v1052, %v1026
        %v1079 = vmul.f32 %v1053, %v1026
        %v1080 = vadd.f32 %v1076, %v1078
        %v1081 = vadd.f32 %v1077, %v1079
        %v1082 = vld [vmem:[%s268 + $0x30] sm:$0xff]
        %v1083 = vld [vmem:[%s268 + $0x38] sm:$0xff]
        %v1084 = vmul.f32 %v1006, %v1074
        %v1085 = vmul.f32 %v1006, %v1075
        %v1086 = vsub.f32 %v1082, %v1084
        %v1087 = vsub.f32 %v1083, %v1085
        %v1088 = vmul.f32 %v1086, 10.0
        %v1089 = vmul.f32 %v1087, 10.0
        %1090 = vst [vmem:[%s310 + $0x30] sm:$0xff] %v1088
        %1091 = vst [vmem:[%s310 + $0x38] sm:$0xff] %v1089
        %v1092 = vmul.f32 %v1074, %v1019
        %v1093 = vmul.f32 %v1075, %v1019
        %v1094 = vmul.f32 %v1080, %v1026
        %v1095 = vmul.f32 %v1081, %v1026
        %v1096 = vsub.f32 %v1092, %v1094
        %v1097 = vsub.f32 %v1093, %v1095
        %v1098 = vmul.f32 %v1080, %v1019
        %v1099 = vmul.f32 %v1081, %v1019
        %v1100 = vmul.f32 %v1074, %v1026
        %v1101 = vmul.f32 %v1075, %v1026
        %v1102 = vadd.f32 %v1098, %v1100
        %v1103 = vadd.f32 %v1099, %v1101
        %v1104 = vld [vmem:[%s268 + $0x40] sm:$0xff]
        %v1105 = vld [vmem:[%s268 + $0x48] sm:$0xff]
        %v1106 = vmul.f32 %v1006, %v1096
        %v1107 = vmul.f32 %v1006, %v1097
        %v1108 = vsub.f32 %v1104, %v1106
        %v1109 = vsub.f32 %v1105, %v1107
        %v1110 = vmul.f32 %v1108, 10.0
        %v1111 = vmul.f32 %v1109, 10.0
        %1112 = vst [vmem:[%s310 + $0x40] sm:$0xff] %v1110
        %1113 = vst [vmem:[%s310 + $0x48] sm:$0xff] %v1111
        %v1114 = vmul.f32 %v1096, %v1019
        %v1115 = vmul.f32 %v1097, %v1019
        %v1116 = vmul.f32 %v1102, %v1026
        %v1117 = vmul.f32 %v1103, %v1026
        %v1118 = vsub.f32 %v1114, %v1116
        %v1119 = vsub.f32 %v1115, %v1117
        %v1120 = vmul.f32 %v1102, %v1019
        %v1121 = vmul.f32 %v1103, %v1019
        %v1122 = vmul.f32 %v1096, %v1026
        %v1123 = vmul.f32 %v1097, %v1026
        %v1124 = vadd.f32 %v1120, %v1122
        %v1125 = vadd.f32 %v1121, %v1123
        %v1126 = vld [vmem:[%s268 + $0x50] sm:$0xff]
        %v1127 = vld [vmem:[%s268 + $0x58] sm:$0xff]
        %v1128 = vmul.f32 %v1006, %v1118
        %v1129 = vmul.f32 %v1006, %v1119
        %v1130 = vsub.f32 %v1126, %v1128
        %v1131 = vsub.f32 %v1127, %v1129
        %v1132 = vmul.f32 %v1130, 10.0
        %v1133 = vmul.f32 %v1131, 10.0
        %1134 = vst [vmem:[%s310 + $0x50] sm:$0xff] %v1132
        %1135 = vst [vmem:[%s310 + $0x58] sm:$0xff] %v1133
        %v1136 = vmul.f32 %v1118, %v1019
        %v1137 = vmul.f32 %v1119, %v1019
        %v1138 = vmul.f32 %v1124, %v1026
        %v1139 = vmul.f32 %v1125, %v1026
        %v1140 = vsub.f32 %v1136, %v1138
        %v1141 = vsub.f32 %v1137, %v1139
        %v1142 = vmul.f32 %v1124, %v1019
        %v1143 = vmul.f32 %v1125, %v1019
        %v1144 = vmul.f32 %v1118, %v1026
        %v1145 = vmul.f32 %v1119, %v1026
        %v1146 = vadd.f32 %v1142, %v1144
        %v1147 = vadd.f32 %v1143, %v1145
        %v1148 = vld [vmem:[%s268 + $0x60] sm:$0xff]
        %v1149 = vld [vmem:[%s268 + $0x68] sm:$0xff]
        %v1150 = vmul.f32 %v1006, %v1140
        %v1151 = vmul.f32 %v1006, %v1141
        %v1152 = vsub.f32 %v1148, %v1150
        %v1153 = vsub.f32 %v1149, %v1151
        %v1154 = vmul.f32 %v1152, 10.0
        %v1155 = vmul.f32 %v1153, 10.0
        %1156 = vst [vmem:[%s310 + $0x60] sm:$0xff] %v1154
        %1157 = vst [vmem:[%s310 + $0x68] sm:$0xff] %v1155
        %v1158 = vmul.f32 %v1140, %v1019
        %v1159 = vmul.f32 %v1141, %v1019
        %v1160 = vmul.f32 %v1146, %v1026
        %v1161 = vmul.f32 %v1147, %v1026
        %v1162 = vsub.f32 %v1158, %v1160
        %v1163 = vsub.f32 %v1159, %v1161
        %v1164 = vld [vmem:[%s268 + $0x70] sm:$0xff]
        %v1165 = vld [vmem:[%s268 + $0x78] sm:$0xff]
        %v1166 = vmul.f32 %v1006, %v1162
        %v1167 = vmul.f32 %v1006, %v1163
        %v1168 = vsub.f32 %v1164, %v1166
        %v1169 = vsub.f32 %v1165, %v1167
        %v1170 = vmul.f32 %v1168, 10.0
        %v1171 = vmul.f32 %v1169, 10.0
        %1172 = vst [vmem:[%s310 + $0x70] sm:$0xff] %v1170
        %1173 = vst [vmem:[%s310 + $0x78] sm:$0xff] %v1171
        %s1174 = sand.u32 %s176, 1
        %s1175 = scalar_lea.sflag [#allocation4], %s1174
        %s1176 = sand.u32 %s176, 1
        %s1177 = smul.addr %s1176, 128
        %s1178 = scalar_lea.vmem [#allocation5], %s1177
        // Predicated region
        $region45: #{tpu_custom_call.1} parent=39 // pred_check
          %p1179 = pneg %p186
        $region46: #{tpu_custom_call.1} parent=39 // pred_check_branch
          %1181 = sbr.rel (%p1179) target = $region48
        $region47: #{tpu_custom_call.1} parent=39 // pred_region
          %s1182 = smul.u32 16, %s27
          %s1184 = ssub.s32 2048, 2048
          %1185 = vsyncadd %s1175, %s1184
          %s1186 = smul.addr %s26, 16
          %s1187 = sadd.s32 %s1182, %s1186
          %s1188 = smul.addr %s1187, 128
          %s1189 = scalar_lea.hbm %s5, %s1188
          %s1191 = sshll.u32 %s1178, 4
          %s1192 = int_to_ptr.vmem [resolvable:$true] %s1191
          %1194 = dma.vmem_to_hbm [thread:$0]  %s1192, 2048, %s1189, %s1175
        $region48: #{tpu_custom_call.1} parent=39 // pred_fallthru
          _
      $region40: #{tpu_custom_call.1} parent=5 // pred_fallthru
        _
      %p1195 = scmp.le.s32.totalorder 2, %s17
      // Predicated region
      $region49: #{tpu_custom_call.1} parent=5 // pred_check
        %p1196 = pneg %p1195
      $region50: #{tpu_custom_call.1} parent=5 // pred_check_branch
        %1198 = sbr.rel (%p1196) target = $region52
      $region51: #{tpu_custom_call.1} parent=5 // pred_region
        %s1199 = ssub.s32 %s17, 2
        // Predicated region
        $region53: #{tpu_custom_call.1} parent=51 // pred_check
          %p1200 = pneg %p192
        $region54: #{tpu_custom_call.1} parent=51 // pred_check_branch
          %1202 = sbr.rel (%p1200) target = $region56
        $region55: #{tpu_custom_call.1} parent=51 // pred_region
          %s1203 = sand.u32 %s177, 1
          %s1204 = scalar_lea.sflag [#allocation4], %s1203
          %s1205 = sand.u32 %s177, 1
          %s1206 = smul.addr %s1205, 128
          %s1207 = scalar_lea.vmem [#allocation5], %s1206
          %1208 = dma.done %s1204, 2048
        $region56: #{tpu_custom_call.1} parent=51 // pred_fallthru
          _
      $region52: #{tpu_custom_call.1} parent=5 // pred_fallthru
        _
    $region6: #{tpu_custom_call.1} parent=1 // loop_footer
      %s21 = sadd.s32 1, %s17
    $region7: #{tpu_custom_call.1} parent=1 // loop_footer_branch
      %16 = sbr.rel target = $region3
    $region8: #{tpu_custom_call.1} parent=1 // loop_exit
      _
    %1209 = vsyncpa [#allocation3], 1
    %s1210 = scalar_lea.sflag [#allocation3], 1
    %1211 = vsyncpa %s1210, 1
    %1212 = vsyncpa [#allocation4], 1
    %s1213 = scalar_lea.sflag [#allocation4], 1
    %1214 = vsyncpa %s1213, 1

</llo_original>
